<compile_context>
chip_gen: v5e
topology: v5e:2x2
jax: 0.10.0
libtpu: 0.0.40
codegen_flags: <defaults>
</compile_context>

<pallas_src>
import functools

import jax
import jax.numpy as jnp
from jax.experimental import pallas as pl
from jax.experimental.pallas import tpu as pltpu

IN_FEATURES = 42
OUT_FEATURES = 3
# 16384 rows/tile: in the recommended range for v5e (8-16K), v6e (16-32K) and
# v7x (8-16K); ~16 MiB of double-buffered x tiles in VMEM.
TB_DEFAULT = 16384
VMEM_LIMIT_BYTES = 40 * 1024 * 1024


def _round_up(n, m):
    return ((n + m - 1) // m) * m


def net_kernel(x_ref, w_ref, b_ref, o_ref):
    # x_ref: (TB, 42)  w_ref: (3, 42)  b_ref: (3, 1)  o_ref: (3, TB)
    x = x_ref[...]
    w = w_ref[...]
    b = b_ref[...]

    # (3, TB) = W(3,42) . X(TB,42)^T : contract the 42-feature axis of both
    # operands (q @ k^T-style dimension numbers), MXU with f32 accumulate.
    y = jax.lax.dot_general(
        w, x,
        dimension_numbers=(((1,), (1,)), ((), ())),
        preferred_element_type=jnp.float32,
    ) + b  # bias broadcasts over the TB lane axis

    # ReLU (VPU)
    y = jnp.maximum(y, 0.0)

    # log_softmax over the class axis (dim=1 of the original (B, 3) layout),
    # which is now the 3-row sublane axis -> a couple of VPU max/add ops.
    m = jnp.max(y, axis=0, keepdims=True)               # (1, TB)
    s = y - m
    lse = jnp.log(jnp.sum(jnp.exp(s), axis=0, keepdims=True))
    o_ref[...] = (s - lse).astype(o_ref.dtype)


@functools.partial(jax.jit, static_argnames=("tb",))
def net_forward_t(x, w, b, *, tb=TB_DEFAULT):
    """Transposed-output variant.

    x: (B, 42) f32, w: (3, 42) f32 (PyTorch (out,in) layout), b: (3,) f32
    -> (3, B) f32 == log_softmax(relu(x @ w.T + b), axis=1).T

    Prefer this when the consumer can take the class-major layout: it skips
    the epilogue transpose entirely.
    """
    B = x.shape[0]

    # Tile size: multiple of 128 (lane-dense output tile); clamp for small
    # batches.  No host-side padding of x: the final ragged grid tile reads
    # past the end of x (undefined rows), and the corresponding out-of-bounds
    # output lanes are dropped by Pallas, so they never reach the result.
    tb = min(tb, _round_up(max(B, 1), 128))
    grid = (pl.cdiv(B, tb),)

    b2 = b.reshape(OUT_FEATURES, 1)

    cost = pl.CostEstimate(
        flops=2 * B * IN_FEATURES * OUT_FEATURES,
        transcendentals=4 * B,  # 3 exp + 1 log per row
        bytes_accessed=4 * (B * (IN_FEATURES + OUT_FEATURES)
                            + OUT_FEATURES * (IN_FEATURES + 1)),
    )

    return pl.pallas_call(
        net_kernel,
        out_shape=jax.ShapeDtypeStruct((OUT_FEATURES, B), jnp.float32),
        grid_spec=pltpu.PrefetchScalarGridSpec(
            num_scalar_prefetch=0,
            grid=grid,
            in_specs=[
                pl.BlockSpec((tb, IN_FEATURES), lambda i: (i, 0)),
                pl.BlockSpec((OUT_FEATURES, IN_FEATURES), lambda i: (0, 0)),
                pl.BlockSpec((OUT_FEATURES, 1), lambda i: (0, 0)),
            ],
            out_specs=pl.BlockSpec((OUT_FEATURES, tb), lambda i: (0, i)),
        ),
        compiler_params=pltpu.CompilerParams(
            dimension_semantics=("parallel",),
            vmem_limit_bytes=VMEM_LIMIT_BYTES,
        ),
        cost_estimate=cost,
    )(x, w, b2)


@functools.partial(jax.jit, static_argnames=("tb",))
def net_forward(x, w, b, *, tb=TB_DEFAULT):
    """x: (B, 42) f32 -> (B, 3) f32, matching the PyTorch module exactly.

    The small (3,B)->(B,3) transpose stays under this jit; callers that can
    consume the transposed layout should call net_forward_t instead.
    """
    return net_forward_t(x, w, b, tb=tb).T


def init_params(key):
    """Deterministic init mimicking nn.Linear default (U[-1/sqrt(in), 1/sqrt(in)])."""
    kw, kb = jax.random.split(key)
    bound = 1.0 / jnp.sqrt(jnp.float32(IN_FEATURES))
    # PyTorch stores weight as (out, in); the kernel consumes it as-is.
    w = jax.random.uniform(kw, (OUT_FEATURES, IN_FEATURES), jnp.float32, -bound, bound)
    b = jax.random.uniform(kb, (OUT_FEATURES,), jnp.float32, -bound, bound)
    return w, b


def reference_forward(x, w, b):
    y = x @ w.T + b
    y = jnp.maximum(y, 0.0)
    return jax.nn.log_softmax(y, axis=1)


if __name__ == "__main__":
    key = jax.random.PRNGKey(0)
    kx, kp = jax.random.split(key)

    B = 8
    x = jax.random.normal(kx, (B, IN_FEATURES), jnp.float32)
    w, b = init_params(kp)

    out = net_forward(x, w, b)
    out = jax.block_until_ready(out)

    ref = reference_forward(x, w, b)
    assert out.shape == (B, OUT_FEATURES)
    assert jnp.allclose(out, ref, atol=1e-5, rtol=1e-5), "mismatch vs reference"

    # Also exercise a batch that is NOT a multiple of the tile size to cover
    # the ragged final grid tile (no host-side padding path).
    B2 = 300
    x2 = jax.random.normal(kx, (B2, IN_FEATURES), jnp.float32)
    out2 = jax.block_until_ready(net_forward(x2, w, b))
    ref2 = reference_forward(x2, w, b)
    assert out2.shape == (B2, OUT_FEATURES)
    assert jnp.allclose(out2, ref2, atol=1e-5, rtol=1e-5), "mismatch vs reference (ragged)"

    print("KERNEL_OK")
</pallas_src>

<mosaic_0001>
module attributes {stable_mosaic.version = 11 : i64} {
  func.func @net_kernel(%arg0: i32, %arg1: memref<128x42xf32, #tpu.memory_space<vmem>>, %arg2: memref<3x42xf32, #tpu.memory_space<vmem>>, %arg3: memref<3x1xf32, #tpu.memory_space<vmem>>, %arg4: memref<3x128xf32, #tpu.memory_space<vmem>>) attributes {dimension_semantics = [#tpu.dimension_semantics<parallel>], iteration_bounds = array<i64: 1>, scalar_prefetch = 0 : i64, scratch_operands = 0 : i64, tpu.core_type = #tpu.core_type<tc>, window_params = [{transform_indices = @transform_0, window_bounds = array<i64: 128, 42>}, {pipeline_mode = #tpu.pipeline_mode<synchronous>, transform_indices = @transform_1, window_bounds = array<i64: 3, 42>}, {pipeline_mode = #tpu.pipeline_mode<synchronous>, transform_indices = @transform_2, window_bounds = array<i64: 3, 1>}, {transform_indices = @transform_3, window_bounds = array<i64: 3, 128>}]} {
    %c0 = arith.constant 0 : index
    %c0_0 = arith.constant 0 : index
    %0 = vector.load %arg1[%c0, %c0_0] : memref<128x42xf32, #tpu.memory_space<vmem>>, vector<128x42xf32>
    %c0_1 = arith.constant 0 : index
    %c0_2 = arith.constant 0 : index
    %1 = vector.load %arg2[%c0_1, %c0_2] : memref<3x42xf32, #tpu.memory_space<vmem>>, vector<3x42xf32>
    %c0_3 = arith.constant 0 : index
    %c0_4 = arith.constant 0 : index
    %2 = vector.load %arg3[%c0_3, %c0_4] : memref<3x1xf32, #tpu.memory_space<vmem>>, vector<3x1xf32>
    %cst = arith.constant dense<0.000000e+00> : vector<3x128xf32>
    %3 = tpu.matmul %1, %0, %cst {dimension_numbers = #tpu.dot_dimension_numbers<[1], [1], [0], [0], [0, 0, 1, 0], [], []>} : vector<3x42xf32>, vector<128x42xf32>, vector<3x128xf32> -> vector<3x128xf32>
    %4 = vector.broadcast %2 : vector<3x1xf32> to vector<3x128xf32>
    %5 = arith.addf %3, %4 : vector<3x128xf32>
    %cst_5 = arith.constant 0.000000e+00 : f32
    %6 = vector.broadcast %cst_5 : f32 to vector<3x128xf32>
    %7 = arith.maximumf %5, %6 : vector<3x128xf32>
    %cst_6 = arith.constant dense<0xFF800000> : vector<128xf32>
    %8 = vector.multi_reduction <maximumf>, %7, %cst_6 [0] : vector<3x128xf32> to vector<128xf32>
    %9 = vector.shape_cast %8 : vector<128xf32> to vector<1x128xf32>
    %10 = vector.broadcast %9 : vector<1x128xf32> to vector<3x128xf32>
    %11 = arith.subf %7, %10 : vector<3x128xf32>
    %12 = math.exp %11 : vector<3x128xf32>
    %cst_7 = arith.constant dense<0.000000e+00> : vector<128xf32>
    %13 = vector.multi_reduction <add>, %12, %cst_7 [0] : vector<3x128xf32> to vector<128xf32>
    %14 = vector.shape_cast %13 : vector<128xf32> to vector<1x128xf32>
    %15 = math.log %14 : vector<1x128xf32>
    %16 = vector.broadcast %15 : vector<1x128xf32> to vector<3x128xf32>
    %17 = arith.subf %11, %16 : vector<3x128xf32>
    %c0_8 = arith.constant 0 : index
    %c0_9 = arith.constant 0 : index
    %18 = vector.load %arg4[%c0_8, %c0_9] : memref<3x128xf32, #tpu.memory_space<vmem>>, vector<3x128xf32>
    tpu.vector_store %arg4[%c0_8, %c0_9], %17 {strides = array<i32>} : memref<3x128xf32, #tpu.memory_space<vmem>>, vector<3x128xf32>,
    return
  }
  func.func @transform_0(%arg0: i32) -> (i32, i32) {
    %c0_i32 = arith.constant 0 : i32
    %c0_i32_0 = arith.constant 0 : i32
    return %arg0, %c0_i32 : i32, i32
  }
  func.func @transform_1(%arg0: i32) -> (i32, i32) {
    %c0_i32 = arith.constant 0 : i32
    %c0_i32_0 = arith.constant 0 : i32
    %c0_i32_1 = arith.constant 0 : i32
    return %c0_i32, %c0_i32_0 : i32, i32
  }
  func.func @transform_2(%arg0: i32) -> (i32, i32) {
    %c0_i32 = arith.constant 0 : i32
    %c0_i32_0 = arith.constant 0 : i32
    %c0_i32_1 = arith.constant 0 : i32
    return %c0_i32, %c0_i32_0 : i32, i32
  }
  func.func @transform_3(%arg0: i32) -> (i32, i32) {
    %c0_i32 = arith.constant 0 : i32
    %c0_i32_0 = arith.constant 0 : i32
    return %c0_i32, %arg0 : i32, i32
  }
}

</mosaic_0001>

<llo_original>
// kernel: net_forward_t.1
$region0: #{net_forward_t.1}
  #allocation0 [shape = 'u32[]', space=smem, size = 0x4, offset = 0x4, fixed_abs, tag = 'smem constant byte address 0x4 - core index']
  #allocation1 [shape = 'u32[72,128]{1,0:T(1,128)}', space=vmem, size = 0x9000, scoped, tag = 'internal scratch']
  %s0 = inlined_call_operand.hbm [shape: f32[8,42], index: 0, kind: input, shape index: {}]
  %s1 = inlined_call_operand.vmem [shape: f32[3,42], index: 1, kind: input, shape index: {}]
  %s2 = inlined_call_operand.vmem [shape: f32[3,1], index: 2, kind: input, shape index: {}]
  %s3 = inlined_call_operand.hbm [shape: f32[3,8], index: 3, kind: output, shape index: {}]
  %s4 = sld [smem:[#allocation0]]
  $region26: #{net_forward_t.1} parent=0
    _
  %s6 = ssub.s32 1, %s4
  %s7 = scalar_select 0, %s6, %s4
  $region1: #{net_forward_t.1} parent=0
    #allocation2 [shape = 'u8[65536]{0}', space=vmem, size = 0x10000, scoped, tag = 'input window, operand 0, single buffered']
    #allocation3 [shape = 's32[1]{0}', space=sflag, size = 0x4, scoped, tag = 'scoped memory for net_forward_t.1']
    #allocation4 [shape = 's32[1]{0}', space=sflag, size = 0x4, scoped, tag = 'scoped memory for net_forward_t.1']
    #allocation5 [shape = 'u8[2048]{0}', space=vmem, size = 0x800, scoped, tag = 'output window, operand 0, single buffered']
    %8 = vsyncpa [#allocation3], 0
    %9 = vsyncpa [#allocation4], 0
    // Predicated region
    $region2: #{net_forward_t.1} parent=1 // pred_check
      _
    $region3: #{net_forward_t.1} parent=1 // pred_check_branch
      %11 = sbr.rel (0) target = $region5
    $region4: #{net_forward_t.1} parent=1 // pred_region
      %13 = vsyncadd [#allocation3], 1920
      %s14 = sshll.u32 %s0, 4
      %s15 = int_to_ptr.hbm [resolvable:$true] %s14
      %s16 = sshll.u32 [#allocation2], 4
      %s17 = int_to_ptr.vmem [resolvable:$true] %s16
      %22 = dma.hbm_to_vmem [thread:$0]  %s15, 128, %s17, [#allocation3], 128, 128, 8
    $region5: #{net_forward_t.1} parent=1 // pred_fallthru
      _
    // Predicated region
    $region6: #{net_forward_t.1} parent=1 // pred_check
      _
    $region7: #{net_forward_t.1} parent=1 // pred_check_branch
      %24 = sbr.rel (0) target = $region9
    $region8: #{net_forward_t.1} parent=1 // pred_region
      _
    $region9: #{net_forward_t.1} parent=1 // pred_fallthru
      _
    // Predicated region
    $region10: #{net_forward_t.1} parent=1 // pred_check
      _
    $region11: #{net_forward_t.1} parent=1 // pred_check_branch
      %26 = sbr.rel (0) target = $region13
    $region12: #{net_forward_t.1} parent=1 // pred_region
      _
    $region13: #{net_forward_t.1} parent=1 // pred_fallthru
      _
    // Predicated region
    $region14: #{net_forward_t.1} parent=1 // pred_check
      _
    $region15: #{net_forward_t.1} parent=1 // pred_check_branch
      %28 = sbr.rel (0) target = $region17
    $region16: #{net_forward_t.1} parent=1 // pred_region
      %30 = dma.done [#allocation3], 2048
    $region17: #{net_forward_t.1} parent=1 // pred_fallthru
      _
    %v31 = vld [vmem:[#allocation2] sm:$0xff]
    %v32 = vld [vmem:[#allocation2 + $0x8] sm:$0xff]
    %v33 = vld [vmem:[#allocation2 + $0x10] sm:$0xff]
    %v34 = vld [vmem:[#allocation2 + $0x18] sm:$0xff]
    %v35 = vld [vmem:[#allocation2 + $0x20] sm:$0xff]
    %v36 = vld [vmem:[#allocation2 + $0x28] sm:$0xff]
    %v37 = vld [vmem:[#allocation2 + $0x30] sm:$0xff]
    %v38 = vld [vmem:[#allocation2 + $0x38] sm:$0xff]
    %v39 = vld [vmem:[#allocation2 + $0x40] sm:$0xff]
    %v40 = vld [vmem:[#allocation2 + $0x48] sm:$0xff]
    %v41 = vld [vmem:[#allocation2 + $0x50] sm:$0xff]
    %v42 = vld [vmem:[#allocation2 + $0x58] sm:$0xff]
    %v43 = vld [vmem:[#allocation2 + $0x60] sm:$0xff]
    %v44 = vld [vmem:[#allocation2 + $0x68] sm:$0xff]
    %v45 = vld [vmem:[#allocation2 + $0x70] sm:$0xff]
    %v46 = vld [vmem:[#allocation2 + $0x78] sm:$0xff]
    %v47 = vld [vmem:[%s1] sm:$0x7]
    %v48 = vld [vmem:[%s2] sm:$0x7]
    %50 = vset.pattern.permute.xlu0 0
    %51 = vperm.xlu0 %50, %v48
    %v52 = vpop.permute.xlu0 %51
    %vm54 = vcmask 343040
    %v56 = vsel %vm54, %v47, 0
    %v59 = vsel %vm54, %v31, 0
    %v62 = vsel %vm54, %v32, 0
    %v65 = vsel %vm54, %v33, 0
    %v68 = vsel %vm54, %v34, 0
    %v71 = vsel %vm54, %v35, 0
    %v74 = vsel %vm54, %v36, 0
    %v77 = vsel %vm54, %v37, 0
    %v80 = vsel %vm54, %v38, 0
    %v83 = vsel %vm54, %v39, 0
    %v86 = vsel %vm54, %v40, 0
    %v89 = vsel %vm54, %v41, 0
    %v92 = vsel %vm54, %v42, 0
    %v95 = vsel %vm54, %v43, 0
    %v98 = vsel %vm54, %v44, 0
    %v101 = vsel %vm54, %v45, 0
    %v104 = vsel %vm54, %v46, 0
    %106 = vmatpush.xpose.msra.mxu0 %v104
    %107 = vmatpush.xpose.msra.mxu0 %v101
    %108 = vmatpush.xpose.msra.mxu0 %v98
    %109 = vmatpush.xpose.msra.mxu0 %v95
    %110 = vmatpush.xpose.msra.mxu0 %v92
    %111 = vmatpush.xpose.msra.mxu0 %v89
    %112 = vmatpush.xpose.msra.mxu0 %v86
    %113 = vmatpush.xpose.msra.mxu0 %v83
    %114 = vmatpush.xpose.msra.mxu0 %v80
    %115 = vmatpush.xpose.msra.mxu0 %v77
    %116 = vmatpush.xpose.msra.mxu0 %v74
    %117 = vmatpush.xpose.msra.mxu0 %v71
    %118 = vmatpush.xpose.msra.mxu0 %v68
    %119 = vmatpush.xpose.msra.mxu0 %v65
    %120 = vmatpush.xpose.msra.mxu0 %v62
    %121 = vmatpush.xpose.msra.mxu0 %v59
    %122 = vmatmul.f32.gmra.mxu0 %v56
    %v123 = vpop.f32.mrf.mxu0
    %v124 = vadd.f32 %v52, %v123
    %125 = vdwg.mxu0
    %v126 = vmax.f32 %v124, 0.0
    %vm127 = vcmask 1042432
    %v128 = vsel %vm127, %v126, -inf
    %v129 = vrot.slane %v128, 4
    %v130 = vmax.f32 %v128, %v129
    %v131 = vrot.slane %v130, 2
    %v132 = vmax.f32 %v130, %v131
    %v133 = vrot.slane %v132, 1
    %v134 = vmax.f32 %v132, %v133
    %v135 = vsub.f32 %v126, %v134
    %v136 = vmul.f32 %v135, 1.442695
    %v137 = vpow.pop %v136
    %v138 = vsel %vm127, %v137, 0.0
    %v139 = vrot.slane %v138, 4
    %v140 = vadd.f32 %v138, %v139
    %v141 = vrot.slane %v140, 2
    %v142 = vadd.f32 %v140, %v141
    %v143 = vrot.slane %v142, 1
    %v144 = vadd.f32 %v142, %v143
    %v145 = vlog2.pop %v144
    %v146 = vmul.f32 %v145, 0.6931472
    %v147 = vsub.f32 %v135, %v146
    %148 = vst [vmem:[#allocation5] sm:$0x7] %v147
    // Predicated region
    $region18: #{net_forward_t.1} parent=1 // pred_check
      _
    $region19: #{net_forward_t.1} parent=1 // pred_check_branch
      %150 = sbr.rel (0) target = $region21
    $region20: #{net_forward_t.1} parent=1 // pred_region
      %152 = vsyncadd [#allocation4], 0
      %s154 = sshll.u32 [#allocation5], 4
      %s155 = int_to_ptr.vmem [resolvable:$true] %s154
      %s156 = sshll.u32 %s3, 4
      %s157 = int_to_ptr.hbm [resolvable:$true] %s156
      %159 = dma.vmem_to_hbm [thread:$0]  %s155, 64, %s157, [#allocation4]
    $region21: #{net_forward_t.1} parent=1 // pred_fallthru
      _
    // Predicated region
    $region22: #{net_forward_t.1} parent=1 // pred_check
      _
    $region23: #{net_forward_t.1} parent=1 // pred_check_branch
      %161 = sbr.rel (0) target = $region25
    $region24: #{net_forward_t.1} parent=1 // pred_region
      %163 = dma.done [#allocation4], 64
    $region25: #{net_forward_t.1} parent=1 // pred_fallthru
      _
    %164 = vsyncpa [#allocation3], 1
    %165 = vsyncpa [#allocation4], 1

</llo_original>
